<compile_context>
chip_gen: v6e
topology: v6e:2x2x1
jax: 0.10.0
libtpu: 0.0.40
codegen_flags: <defaults>
</compile_context>

<pallas_src>
import jax
import jax.numpy as jnp
from jax import lax
from jax.experimental import pallas as pl
from jax.experimental.pallas import tpu as pltpu


def logistic_regression_loss(x, weight, bias, y, lam, *,
                             block_rows=512, num_parallel=2):
    """Forward of LogisticRegressionNet / MyLoss.

    x: (N, D) float (f32 or bf16, kept in native dtype); weight: (D,);
    bias: (out_dim,) = (1,); y: (N,) in {0,1}; lam: python float / scalar.
    Returns the scalar loss as f32.
    """
    N, D = x.shape
    w2 = weight.astype(jnp.float32).reshape(1, D)
    y2 = y.astype(jnp.float32).reshape(N, 1)
    b1 = jnp.asarray(bias, jnp.float32).reshape(1)
    lam1 = jnp.asarray(lam, jnp.float32).reshape(1)

    # ---- row-tile sizing: keep each x buffer around 4 MiB so 2x double-buffered
    # input stays well inside the scoped VMEM limit on every generation (incl. v7x).
    target_tile_bytes = 4 * 1024 * 1024
    row_bytes = D * x.dtype.itemsize
    tn = min(block_rows, max(8, target_tile_bytes // row_bytes))
    if N <= tn:
        tn = N                             # full-dim block: always layout-legal
    else:
        tn = max(32, (tn // 32) * 32)      # aligned tile (safe for f32 and bf16)

    n_row_blocks = pl.cdiv(N, tn)
    p = min(num_parallel, n_row_blocks)    # parallel slots (2 TCs on v7x megacore)
    s = pl.cdiv(n_row_blocks, p)           # sequential reduction steps per slot
    inv_n = 1.0 / N

    def kernel(x_ref, w_ref, b_ref, y_ref, lam_ref, part_ref):
        pi = pl.program_id(0)              # parallel slot
        si = pl.program_id(1)              # reduction step within the slot

        @pl.when(si == 0)
        def _init():
            part_ref[...] = jnp.zeros_like(part_ref)

        x_blk = x_ref[...].astype(jnp.float32)     # (tn, D)
        w = w_ref[...]                              # (1, D) f32, resident
        yb = y_ref[...]                             # (tn, 1) f32

        # VPU multiply + lane reduce (no MXU matvec / no transpose).
        z = jnp.sum(x_blk * w, axis=-1, keepdims=True) + b_ref[0]      # (tn, 1)

        # Stable BCE-with-logits: -[y log s(z) + (1-y) log(1-s(z))]
        #                       =  max(z,0) - y*z + log(1 + exp(-|z|))
        bce = (jnp.maximum(z, 0.0) - yb * z
               + jnp.log(1.0 + jnp.exp(-jnp.abs(z))))                   # (tn, 1)

        # Mask rows past N (partial last tile / duplicated clamped blocks).
        start = (pi * s + si) * tn
        rows = start + lax.broadcasted_iota(jnp.int32, (tn, 1), 0)
        bce = jnp.where(rows < N, bce, 0.0)

        tile_sum = jnp.sum(bce, axis=0, keepdims=True)                  # (1, 1)
        part_ref[...] = part_ref[...] + tile_sum.reshape(1, 1, 1)

        @pl.when(si == s - 1)
        def _finalize():
            # Hoisted L1 box-projection penalty: computed once, added by the last
            # parallel slot only; every slot scales its partial BCE sum by 1/N.
            pw = jnp.clip(w, -1.0, 1.0)
            l1 = jnp.sum(jnp.abs(w - pw), axis=-1, keepdims=True)       # (1, 1)
            reg = jnp.where(pi == p - 1, lam_ref[0] * l1, 0.0)          # (1, 1)
            part_ref[...] = part_ref[...] * inv_n + reg.reshape(1, 1, 1)

    def row_block(pi, si):
        # Clamp so the block index is always in range; the in-kernel mask discards
        # any duplicated rows from clamping.
        return (jnp.minimum(pi * s + si, n_row_blocks - 1), 0)

    out = pl.pallas_call(
        kernel,
        out_shape=jax.ShapeDtypeStruct((p, 1, 128), jnp.float32),
        grid=(p, s),
        in_specs=[
            pl.BlockSpec((tn, D), row_block),                            # x tile
            pl.BlockSpec((1, D), lambda pi, si: (0, 0)),                 # w (resident)
            pl.BlockSpec(memory_space=pltpu.MemorySpace.SMEM),           # bias scalar
            pl.BlockSpec((tn, 1), row_block),                            # y tile
            pl.BlockSpec(memory_space=pltpu.MemorySpace.SMEM),           # lam scalar
        ],
        out_specs=pl.BlockSpec((1, 1, 128), lambda pi, si: (pi, 0, 0)),
        compiler_params=pltpu.CompilerParams(
            dimension_semantics=("parallel", "arbitrary")),
    )(x, w2, b1, y2, lam1)

    return jnp.sum(out[:, 0, 0])


def _reference_loss(x, weight, bias, y, lam):
    """Literal port of the PyTorch MyLoss.forward formula (naive log(sigmoid))."""
    y_hat = jax.nn.sigmoid(x @ weight + bias[0])
    pw = jnp.clip(weight, -1.0, 1.0)
    return (-jnp.mean(y * jnp.log(y_hat) + (1.0 - y) * jnp.log(1.0 - y_hat))
            + lam * jnp.sum(jnp.abs(weight - pw)))


if __name__ == "__main__":
    key = jax.random.PRNGKey(0)
    kx, kw, ky = jax.random.split(key, 3)

    # Case 1: small shape matching the module (in_dim=32, out_dim=1, batch=8).
    N, D = 8, 32
    out_dim = 1
    lam = 0.1

    x = jax.random.normal(kx, (N, D), dtype=jnp.float32)
    # Well-conditioned weights (no sigmoid saturation) with a couple of entries
    # outside [-1, 1] so the L1 projection penalty is exercised.
    weight = 0.4 * jax.random.normal(kw, (D,), dtype=jnp.float32)
    weight = weight.at[0].set(1.6).at[1].set(-1.3)
    bias = jnp.zeros((out_dim,), dtype=jnp.float32)
    y = (jax.random.uniform(ky, (N,)) > 0.5).astype(jnp.float32)

    loss = jax.block_until_ready(logistic_regression_loss(x, weight, bias, y, lam))
    ref = _reference_loss(x, weight, bias, y, lam)
    assert jnp.isfinite(loss), loss
    assert jnp.allclose(loss, ref, rtol=1e-5, atol=1e-5), (loss, ref)

    # Case 2: larger batch exercising the tiled grid, the 2-slot parallel axis,
    # and masking of the partial last tile (200 rows with 64-row blocks).
    N2, D2 = 200, 32
    x2 = jax.random.normal(kx, (N2, D2), dtype=jnp.float32)
    y2 = (jax.random.uniform(ky, (N2,)) > 0.5).astype(jnp.float32)
    w2 = 0.25 * jax.random.normal(kw, (D2,), dtype=jnp.float32)
    w2 = w2.at[3].set(-1.7)
    loss2 = jax.block_until_ready(
        logistic_regression_loss(x2, w2, bias, y2, lam, block_rows=64))
    ref2 = _reference_loss(x2, w2, bias, y2, lam)
    assert jnp.isfinite(loss2), loss2
    assert jnp.allclose(loss2, ref2, rtol=1e-5, atol=1e-5), (loss2, ref2)

    print("KERNEL_OK")
</pallas_src>

<mosaic_0001>
module attributes {stable_mosaic.version = 11 : i64} {
  func.func @kernel(%arg0: i32, %arg1: i32, %arg2: memref<8x32xf32, #tpu.memory_space<vmem>>, %arg3: memref<1x32xf32, #tpu.memory_space<vmem>>, %arg4: memref<1xf32, #tpu.memory_space<smem>>, %arg5: memref<8x1xf32, #tpu.memory_space<vmem>>, %arg6: memref<1xf32, #tpu.memory_space<smem>>, %arg7: memref<1x1x128xf32, #tpu.memory_space<vmem>>) attributes {dimension_semantics = [#tpu.dimension_semantics<parallel>, #tpu.dimension_semantics<arbitrary>], iteration_bounds = array<i64: 1, 1>, scalar_prefetch = 0 : i64, scratch_operands = 0 : i64, tpu.core_type = #tpu.core_type<tc>, window_params = [{transform_indices = @transform_0, window_bounds = array<i64: 8, 32>}, {pipeline_mode = #tpu.pipeline_mode<synchronous>, transform_indices = @transform_1, window_bounds = array<i64: 1, 32>}, {transform_indices = @transform_2, window_bounds = array<i64: 1>}, {transform_indices = @transform_3, window_bounds = array<i64: 8, 1>}, {transform_indices = @transform_4, window_bounds = array<i64: 1>}, {transform_indices = @transform_5, window_bounds = array<i64: 1, 1, 128>}]} {
    %c0_i32 = arith.constant 0 : i32
    %0 = arith.cmpi eq, %arg1, %c0_i32 : i32
    %1 = arith.extui %0 : i1 to i32
    %c0_i32_0 = arith.constant 0 : i32
    %2 = arith.cmpi ne, %1, %c0_i32_0 : i32
    scf.if %2 {
      %cst_21 = arith.constant 0.000000e+00 : f32
      %45 = vector.broadcast %cst_21 : f32 to vector<1x1x128xf32>
      %c0_22 = arith.constant 0 : index
      %c0_23 = arith.constant 0 : index
      %c0_24 = arith.constant 0 : index
      %46 = vector.load %arg7[%c0_22, %c0_23, %c0_24] : memref<1x1x128xf32, #tpu.memory_space<vmem>>, vector<1x1x128xf32>
      tpu.vector_store %arg7[%c0_22, %c0_23, %c0_24], %45 {strides = array<i32>} : memref<1x1x128xf32, #tpu.memory_space<vmem>>, vector<1x1x128xf32>,
    } else {
    }
    %c0 = arith.constant 0 : index
    %c0_1 = arith.constant 0 : index
    %3 = vector.load %arg2[%c0, %c0_1] : memref<8x32xf32, #tpu.memory_space<vmem>>, vector<8x32xf32>
    %c0_2 = arith.constant 0 : index
    %c0_3 = arith.constant 0 : index
    %4 = vector.load %arg3[%c0_2, %c0_3] : memref<1x32xf32, #tpu.memory_space<vmem>>, vector<1x32xf32>
    %c0_4 = arith.constant 0 : index
    %c0_5 = arith.constant 0 : index
    %5 = vector.load %arg5[%c0_4, %c0_5] : memref<8x1xf32, #tpu.memory_space<vmem>>, vector<8x1xf32>
    %6 = vector.broadcast %4 : vector<1x32xf32> to vector<8x32xf32>
    %7 = arith.mulf %3, %6 : vector<8x32xf32>
    %cst = arith.constant dense<0.000000e+00> : vector<8xf32>
    %8 = vector.multi_reduction <add>, %7, %cst [1] : vector<8x32xf32> to vector<8xf32>
    %9 = vector.shape_cast %8 : vector<8xf32> to vector<8x1xf32>
    %c0_6 = arith.constant 0 : index
    %10 = memref.load %arg4[%c0_6] : memref<1xf32, #tpu.memory_space<smem>>
    %11 = vector.broadcast %10 : f32 to vector<8x1xf32>
    %12 = arith.addf %9, %11 : vector<8x1xf32>
    %cst_7 = arith.constant 0.000000e+00 : f32
    %13 = vector.broadcast %cst_7 : f32 to vector<8x1xf32>
    %14 = arith.maximumf %12, %13 : vector<8x1xf32>
    %15 = arith.mulf %5, %12 : vector<8x1xf32>
    %16 = arith.subf %14, %15 : vector<8x1xf32>
    %17 = math.absf %12 : vector<8x1xf32>
    %cst_8 = arith.constant 0.000000e+00 : f32
    %18 = vector.broadcast %cst_8 : f32 to vector<8x1xf32>
    %19 = arith.subf %18, %17 : vector<8x1xf32>
    %20 = math.exp %19 : vector<8x1xf32>
    %cst_9 = arith.constant 1.000000e+00 : f32
    %21 = vector.broadcast %cst_9 : f32 to vector<8x1xf32>
    %22 = arith.addf %21, %20 : vector<8x1xf32>
    %23 = math.log %22 : vector<8x1xf32>
    %24 = arith.addf %16, %23 : vector<8x1xf32>
    %c1_i32 = arith.constant 1 : i32
    %25 = arith.muli %arg0, %c1_i32 : i32
    %26 = arith.addi %25, %arg1 : i32
    %c8_i32 = arith.constant 8 : i32
    %27 = arith.muli %26, %c8_i32 : i32
    %28 = tpu.iota {dimensions = array<i32: 0>} : vector<8x1xi32>
    %29 = vector.broadcast %27 : i32 to vector<8x1xi32>
    %30 = arith.addi %29, %28 : vector<8x1xi32>
    %c8_i32_10 = arith.constant 8 : i32
    %31 = vector.broadcast %c8_i32_10 : i32 to vector<8x1xi32>
    %32 = arith.cmpi slt, %30, %31 : vector<8x1xi32>
    %cst_11 = arith.constant 0.000000e+00 : f32
    %33 = vector.broadcast %cst_11 : f32 to vector<8x1xf32>
    %34 = arith.select %32, %24, %33 : vector<8x1xi1>, vector<8x1xf32>
    %cst_12 = arith.constant dense<0.000000e+00> : vector<1xf32>
    %35 = vector.multi_reduction <add>, %34, %cst_12 [0] : vector<8x1xf32> to vector<1xf32>
    %36 = vector.shape_cast %35 : vector<1xf32> to vector<1x1xf32>
    %c0_13 = arith.constant 0 : index
    %c0_14 = arith.constant 0 : index
    %c0_15 = arith.constant 0 : index
    %37 = vector.load %arg7[%c0_13, %c0_14, %c0_15] : memref<1x1x128xf32, #tpu.memory_space<vmem>>, vector<1x1x128xf32>
    %38 = vector.shape_cast %36 : vector<1x1xf32> to vector<1x1x1xf32>
    %39 = vector.broadcast %38 : vector<1x1x1xf32> to vector<1x1x128xf32>
    %40 = arith.addf %37, %39 : vector<1x1x128xf32>
    %c0_16 = arith.constant 0 : index
    %c0_17 = arith.constant 0 : index
    %c0_18 = arith.constant 0 : index
    %41 = vector.load %arg7[%c0_16, %c0_17, %c0_18] : memref<1x1x128xf32, #tpu.memory_space<vmem>>, vector<1x1x128xf32>
    tpu.vector_store %arg7[%c0_16, %c0_17, %c0_18], %40 {strides = array<i32>} : memref<1x1x128xf32, #tpu.memory_space<vmem>>, vector<1x1x128xf32>,
    %c0_i32_19 = arith.constant 0 : i32
    %42 = arith.cmpi eq, %arg1, %c0_i32_19 : i32
    %43 = arith.extui %42 : i1 to i32
    %c0_i32_20 = arith.constant 0 : i32
    %44 = arith.cmpi ne, %43, %c0_i32_20 : i32
    scf.if %44 {
      %cst_21 = arith.constant -1.000000e+00 : f32
      %cst_22 = arith.constant 1.000000e+00 : f32
      %45 = vector.broadcast %cst_21 : f32 to vector<1x32xf32>
      %46 = arith.maximumf %45, %4 : vector<1x32xf32>
      %47 = vector.broadcast %cst_22 : f32 to vector<1x32xf32>
      %48 = arith.minimumf %47, %46 : vector<1x32xf32>
      %49 = arith.subf %4, %48 : vector<1x32xf32>
      %50 = math.absf %49 : vector<1x32xf32>
      %cst_23 = arith.constant dense<0.000000e+00> : vector<1xf32>
      %51 = vector.multi_reduction <add>, %50, %cst_23 [1] : vector<1x32xf32> to vector<1xf32>
      %52 = vector.shape_cast %51 : vector<1xf32> to vector<1x1xf32>
      %c0_i32_24 = arith.constant 0 : i32
      %53 = arith.cmpi eq, %arg0, %c0_i32_24 : i32
      %c0_25 = arith.constant 0 : index
      %54 = memref.load %arg6[%c0_25] : memref<1xf32, #tpu.memory_space<smem>>
      %55 = vector.broadcast %54 : f32 to vector<1x1xf32>
      %56 = arith.mulf %55, %52 : vector<1x1xf32>
      %cst_26 = arith.constant 0.000000e+00 : f32
      %57 = vector.broadcast %cst_26 : f32 to vector<1x1xf32>
      %58 = arith.select %53, %56, %57 : vector<1x1xf32>
      %c0_27 = arith.constant 0 : index
      %c0_28 = arith.constant 0 : index
      %c0_29 = arith.constant 0 : index
      %59 = vector.load %arg7[%c0_27, %c0_28, %c0_29] : memref<1x1x128xf32, #tpu.memory_space<vmem>>, vector<1x1x128xf32>
      %cst_30 = arith.constant 1.250000e-01 : f32
      %60 = vector.broadcast %cst_30 : f32 to vector<1x1x128xf32>
      %61 = arith.mulf %59, %60 : vector<1x1x128xf32>
      %62 = vector.shape_cast %58 : vector<1x1xf32> to vector<1x1x1xf32>
      %63 = vector.broadcast %62 : vector<1x1x1xf32> to vector<1x1x128xf32>
      %64 = arith.addf %61, %63 : vector<1x1x128xf32>
      %c0_31 = arith.constant 0 : index
      %c0_32 = arith.constant 0 : index
      %c0_33 = arith.constant 0 : index
      %65 = vector.load %arg7[%c0_31, %c0_32, %c0_33] : memref<1x1x128xf32, #tpu.memory_space<vmem>>, vector<1x1x128xf32>
      tpu.vector_store %arg7[%c0_31, %c0_32, %c0_33], %64 {strides = array<i32>} : memref<1x1x128xf32, #tpu.memory_space<vmem>>, vector<1x1x128xf32>,
    } else {
    }
    return
  }
  func.func @transform_0(%arg0: i32, %arg1: i32) -> (i32, i32) {
    %c1_i32 = arith.constant 1 : i32
    %0 = arith.muli %arg0, %c1_i32 : i32
    %1 = arith.addi %0, %arg1 : i32
    %c0_i32 = arith.constant 0 : i32
    %2 = arith.minsi %1, %c0_i32 : i32
    %c0_i32_0 = arith.constant 0 : i32
    %c0_i32_1 = arith.constant 0 : i32
    return %2, %c0_i32_0 : i32, i32
  }
  func.func @transform_1(%arg0: i32, %arg1: i32) -> (i32, i32) {
    %c0_i32 = arith.constant 0 : i32
    %c0_i32_0 = arith.constant 0 : i32
    %c0_i32_1 = arith.constant 0 : i32
    return %c0_i32, %c0_i32_0 : i32, i32
  }
  func.func @transform_2(%arg0: i32, %arg1: i32) -> i32 {
    %c0_i32 = arith.constant 0 : i32
    %c0_i32_0 = arith.constant 0 : i32
    return %c0_i32 : i32
  }
  func.func @transform_3(%arg0: i32, %arg1: i32) -> (i32, i32) {
    %c1_i32 = arith.constant 1 : i32
    %0 = arith.muli %arg0, %c1_i32 : i32
    %1 = arith.addi %0, %arg1 : i32
    %c0_i32 = arith.constant 0 : i32
    %2 = arith.minsi %1, %c0_i32 : i32
    %c0_i32_0 = arith.constant 0 : i32
    %c0_i32_1 = arith.constant 0 : i32
    return %2, %c0_i32_0 : i32, i32
  }
  func.func @transform_4(%arg0: i32, %arg1: i32) -> i32 {
    %c0_i32 = arith.constant 0 : i32
    %c0_i32_0 = arith.constant 0 : i32
    return %c0_i32 : i32
  }
  func.func @transform_5(%arg0: i32, %arg1: i32) -> (i32, i32, i32) {
    %c0_i32 = arith.constant 0 : i32
    %c0_i32_0 = arith.constant 0 : i32
    %c0_i32_1 = arith.constant 0 : i32
    return %arg0, %c0_i32, %c0_i32_0 : i32, i32, i32
  }
}

</mosaic_0001>

<llo_original>
// kernel: tpu_custom_call.1
$region0: #{tpu_custom_call.1}
  #allocation0 [shape = 'u32[]', space=smem, size = 0x4, offset = 0x4, fixed_abs, tag = 'smem constant byte address 0x4 - core index']
  #allocation1 [shape = 'u32[144,128]{1,0:T(1,128)}', space=vmem, size = 0x12000, scoped, tag = 'internal scratch']
  #allocation2 [shape = 'f32[1]{0:T(128)S(6)}', space=smem, size = 0x200, scoped, tag = 'scoped memory for tpu_custom_call.1']
  #allocation3 [shape = 'f32[1]{0:T(128)S(6)}', space=smem, size = 0x200, scoped, tag = 'scoped memory for tpu_custom_call.1']
  %s0 = inlined_call_operand.vmem [shape: f32[8,32], index: 0, kind: input, shape index: {}]
  %s1 = inlined_call_operand.vmem [shape: f32[1,32], index: 1, kind: input, shape index: {}]
  %s2 = inlined_call_operand.<no memory space> [shape: f32[1], index: 2, kind: input, shape index: {}]
  %s3 = inlined_call_operand.vmem [shape: f32[8,1], index: 3, kind: input, shape index: {}]
  %s4 = inlined_call_operand.<no memory space> [shape: f32[1], index: 4, kind: input, shape index: {}]
  %s5 = inlined_call_operand.hbm [shape: f32[1,1,128], index: 5, kind: output, shape index: {}]
  %s6 = sld [smem:[#allocation0]]
  $region38: #{tpu_custom_call.1} parent=0
    _
  %s8 = ssub.s32 1, %s6
  %s9 = scalar_select 0, %s8, %s6
  %10 = sst [smem:[#allocation2]] %s2
  %11 = sst [smem:[#allocation3]] %s4
  $region1: #{tpu_custom_call.1} parent=0
    #allocation4 [shape = 'u8[512]{0}', space=vmem, size = 0x400, scoped, tag = 'output window, operand 0, single buffered']
    #allocation5 [shape = 's32[1]{0}', space=sflag, size = 0x4, scoped, tag = 'scoped memory for tpu_custom_call.1']
    %12 = vsyncpa [#allocation5], 0
    // Predicated region
    $region2: #{tpu_custom_call.1} parent=1 // pred_check
      _
    $region3: #{tpu_custom_call.1} parent=1 // pred_check_branch
      %14 = sbr.rel (0) target = $region5
    $region4: #{tpu_custom_call.1} parent=1 // pred_region
      %s15 = sadd.s32 0, 0
      %p16 = scmp.lt.s32.totalorder %s15, 0
      %s17 = scalar_select %p16, %s15, 0
      %p18 = scmp.lt.s32.totalorder %s17, 0
      %s19 = scalar_select %p18, %s17, 0
      %s20 = smul.addr %s19, 8
      %s21 = scalar_lea.vmem %s0, %s20
      %s22 = sadd.s32 0, 0
      %p23 = scmp.lt.s32.totalorder %s22, 0
      %s24 = scalar_select %p23, %s22, 0
    $region5: #{tpu_custom_call.1} parent=1 // pred_fallthru
      _
    // Predicated region
    $region6: #{tpu_custom_call.1} parent=1 // pred_check
      _
    $region7: #{tpu_custom_call.1} parent=1 // pred_check_branch
      %26 = sbr.rel (0) target = $region9
    $region8: #{tpu_custom_call.1} parent=1 // pred_region
      _
    $region9: #{tpu_custom_call.1} parent=1 // pred_fallthru
      _
    // Predicated region
    $region10: #{tpu_custom_call.1} parent=1 // pred_check
      _
    $region11: #{tpu_custom_call.1} parent=1 // pred_check_branch
      %28 = sbr.rel (0) target = $region13
    $region12: #{tpu_custom_call.1} parent=1 // pred_region
      _
    $region13: #{tpu_custom_call.1} parent=1 // pred_fallthru
      _
    // Predicated region
    $region14: #{tpu_custom_call.1} parent=1 // pred_check
      _
    $region15: #{tpu_custom_call.1} parent=1 // pred_check_branch
      %30 = sbr.rel (0) target = $region17
    $region16: #{tpu_custom_call.1} parent=1 // pred_region
      %s31 = sadd.s32 0, 0
      %p32 = scmp.lt.s32.totalorder %s31, 0
      %s33 = scalar_select %p32, %s31, 0
      %p34 = scmp.lt.s32.totalorder %s33, 0
      %s35 = scalar_select %p34, %s33, 0
      %s36 = smul.addr %s35, 8
      %s37 = scalar_lea.vmem %s3, %s36
      %s38 = sadd.s32 0, 0
      %p39 = scmp.lt.s32.totalorder %s38, 0
      %s40 = scalar_select %p39, %s38, 0
    $region17: #{tpu_custom_call.1} parent=1 // pred_fallthru
      _
    // Predicated region
    $region18: #{tpu_custom_call.1} parent=1 // pred_check
      _
    $region19: #{tpu_custom_call.1} parent=1 // pred_check_branch
      %42 = sbr.rel (0) target = $region21
    $region20: #{tpu_custom_call.1} parent=1 // pred_region
      _
    $region21: #{tpu_custom_call.1} parent=1 // pred_fallthru
      _
    %s43 = sadd.s32 0, 0
    %p44 = scmp.lt.s32.totalorder %s43, 0
    %s45 = scalar_select %p44, %s43, 0
    %p46 = scmp.lt.s32.totalorder %s45, 0
    %s47 = scalar_select %p46, %s45, 0
    %s48 = smul.addr %s47, 8
    %s49 = scalar_lea.vmem %s0, %s48
    %s50 = sadd.s32 0, 0
    %p51 = scmp.lt.s32.totalorder %s50, 0
    %s52 = scalar_select %p51, %s50, 0
    %p53 = scmp.lt.s32.totalorder %s52, 0
    %s54 = scalar_select %p53, %s52, 0
    %s55 = smul.addr %s54, 8
    %s56 = scalar_lea.vmem %s3, %s55
    %s57 = sadd.s32 0, 0
    %p58 = scmp.lt.s32.totalorder %s57, 0
    %s59 = scalar_select %p58, %s57, 0
    %p60 = scmp.lt.s32.totalorder %s59, 0
    %s61 = scalar_select %p60, %s59, 0
    %s62 = smul.addr %s61, 8
    %s63 = scalar_lea.vmem %s0, %s62
    %s64 = sadd.s32 0, 0
    %p65 = scmp.lt.s32.totalorder %s64, 0
    %s66 = scalar_select %p65, %s64, 0
    %s67 = sadd.s32 0, 0
    %p68 = scmp.lt.s32.totalorder %s67, 0
    %s69 = scalar_select %p68, %s67, 0
    %p70 = scmp.lt.s32.totalorder %s69, 0
    %s71 = scalar_select %p70, %s69, 0
    %s72 = smul.addr %s71, 8
    %s73 = scalar_lea.vmem %s3, %s72
    %s74 = sadd.s32 0, 0
    %p75 = scmp.lt.s32.totalorder %s74, 0
    %s76 = scalar_select %p75, %s74, 0
    %p77 = scmp.eq.s32.totalorder 0, 0
    // Predicated region
    $region22: #{tpu_custom_call.1} parent=1 // pred_check
      %p78 = pneg %p77
    $region23: #{tpu_custom_call.1} parent=1 // pred_check_branch
      %80 = sbr.rel (%p78) target = $region25
    $region24: #{tpu_custom_call.1} parent=1 // pred_region
      %81 = vst [vmem:[#allocation4] sm:$0x1] 0.0
    $region25: #{tpu_custom_call.1} parent=1 // pred_fallthru
      _
    %v82 = vld [vmem:[%s63] sm:$0xff]
    %v83 = vld [vmem:[%s1] sm:$0x1]
    %v84 = vld [vmem:[%s73] sm:$0xff]
    %v86 = vlaneseq
    %v87 = vshrl.u32 %v86, 7
    %v88 = vsub.s32 0, %v87
    %v89 = vrot.slane %v83, %v88
    %v91 = vmul.f32 %v82, %v89
    %vm92 = vcmask 261120
    %v93 = vsel %vm92, %v91, 0.0
    %94 = vadd.xlane.f32.xlu0 %v93
    %v95 = vpop.xlane.xlu0 %94
    %s96 = sld [smem:[#allocation2]]
    %v97 = vstv %s96
    %v98 = vadd.f32 %v95, %v97
    %v99 = vmax.f32 %v98, 0.0
    %v100 = vmul.f32 %v84, %v98
    %v101 = vsub.f32 %v99, %v100
    %v102 = vand.u32 2147483647, %v98
    %v103 = vsub.f32 0.0, %v102
    %v104 = vmul.f32 %v103, 1.442695
    %v105 = vpow.pop %v104
    %v106 = vadd.f32 %v105, 1.0
    %v107 = vlog2.pop %v106
    %v108 = vmul.f32 %v107, 0.6931472
    %v109 = vadd.f32 %v101, %v108
    %s110 = sadd.s32 0, 0
    %s111 = smul.u32 %s110, 8
    %v112 = vlaneseq
    %v113 = vshrl.u32 %v112, 7
    %v114 = vstv %s111
    %v115 = vadd.s32 %v114, %v113
    %vm116 = vcmp.lt.s32.totalorder %v115, 8
    %v117 = vsel %vm116, %v109, 0.0
    %vm118 = vcmask 7168
    %v119 = vsel %vm118, %v117, 0.0
    %v120 = vrot.slane %v119, 4
    %v121 = vadd.f32 %v119, %v120
    %v122 = vrot.slane %v121, 2
    %v123 = vadd.f32 %v121, %v122
    %v124 = vrot.slane %v123, 1
    %v125 = vadd.f32 %v123, %v124
    %v126 = vld [vmem:[#allocation4] sm:$0x1]
    %128 = vset.pattern.permute.xlu0 0
    %129 = vperm.xlu0 %128, %v125
    %v130 = vpop.permute.xlu0 %129
    %v132 = vadd.f32 %v126, %v130
    %133 = vst [vmem:[#allocation4] sm:$0x1] %v132
    // Predicated region
    $region26: #{tpu_custom_call.1} parent=1 // pred_check
      %p134 = pneg %p77
    $region27: #{tpu_custom_call.1} parent=1 // pred_check_branch
      %136 = sbr.rel (%p134) target = $region29
    $region28: #{tpu_custom_call.1} parent=1 // pred_region
      %v137 = vmax.f32 %v83, -1.0
      %v138 = vmin.f32 %v137, 1.0
      %v139 = vsub.f32 %v83, %v138
      %v140 = vand.u32 2147483647, %v139
      %vm141 = vcmask 253952
      %v142 = vsel %vm141, %v140, 0.0
      %143 = vadd.xlane.f32.xlu0 %v142
      %v144 = vpop.xlane.xlu0 %143
      %p145 = scmp.eq.s32.totalorder 0, 0
      %s146 = sld [smem:[#allocation3]]
      %v147 = vstv %s146
      %v148 = vmul.f32 %v147, %v144
      %s149 = scalar_select %p145, 1, 0
      %v150 = vstv %s149
      %vm151 = vcmp.eq.s32.totalorder %v150, 1
      %v152 = vsel %vm151, %v148, 0.0
      %v153 = vld [vmem:[#allocation4] sm:$0x1]
      %v154 = vmul.f32 %v153, 0.125
      %v155 = vadd.f32 %v154, %v152
      %156 = vst [vmem:[#allocation4] sm:$0x1] %v155
    $region29: #{tpu_custom_call.1} parent=1 // pred_fallthru
      _
    // Predicated region
    $region30: #{tpu_custom_call.1} parent=1 // pred_check
      _
    $region31: #{tpu_custom_call.1} parent=1 // pred_check_branch
      %158 = sbr.rel (0) target = $region33
    $region32: #{tpu_custom_call.1} parent=1 // pred_region
      %s160 = ssub.s32 16, 16
      %161 = vsyncadd [#allocation5], %s160
      %s163 = sshll.u32 [#allocation4], 4
      %s164 = int_to_ptr.vmem [resolvable:$true] %s163
      %166 = dma.vmem_to_hbm [thread:$0]  %s164, 16, %s5, [#allocation5]
    $region33: #{tpu_custom_call.1} parent=1 // pred_fallthru
      _
    // Predicated region
    $region34: #{tpu_custom_call.1} parent=1 // pred_check
      _
    $region35: #{tpu_custom_call.1} parent=1 // pred_check_branch
      %168 = sbr.rel (0) target = $region37
    $region36: #{tpu_custom_call.1} parent=1 // pred_region
      %169 = dma.done [#allocation5], 16
    $region37: #{tpu_custom_call.1} parent=1 // pred_fallthru
      _
    %170 = vsyncpa [#allocation5], 1

</llo_original>
